<compile_context>
chip_gen: v5e
topology: v5e:2x2
jax: 0.10.0
libtpu: 0.0.40
codegen_flags: <defaults>
</compile_context>

<pallas_src>
import functools

import jax
import jax.numpy as jnp
from jax.experimental import pallas as pl
from jax.experimental.pallas import tpu as pltpu


def _simam_kernel(x_ref, o_ref, *, n, hw, e_lambda):
    # x_ref: (block_rows, hw_padded) tile in VMEM
    x = x_ref[...].astype(jnp.float32)

    # Two independent row reductions in a single pass over the tile.
    sum_x = jnp.sum(x, axis=-1, keepdims=True)        # (rows, 1)
    sum_x2 = jnp.sum(x * x, axis=-1, keepdims=True)   # (rows, 1)

    mu = sum_x * (1.0 / hw)                            # mean over TRUE hw
    s = sum_x2 - mu * sum_x                            # sum((x - mu)^2)

    # Per-row reciprocal (EUP) instead of a full-width per-element divide.
    denom = s * (4.0 / n) + (4.0 * e_lambda)           # (rows, 1)
    inv = pl.reciprocal(denom, approx=True)            # (rows, 1)

    d = x - mu
    y = (d * d) * inv + 0.5
    o_ref[...] = (x * jax.nn.sigmoid(y)).astype(o_ref.dtype)


def simam(x, e_lambda=1e-4):
    """x: (B, C, H, W) -> (B, C, H, W), SimAM attention applied."""
    b, c, h, w = x.shape
    hw = h * w
    n = float(hw - 1)
    rows = b * c
    itemsize = jnp.dtype(x.dtype).itemsize

    # Lane-dense last dim: pad H*W to a multiple of 128. Zero padding is
    # harmless for the sums; mean/variance use the true hw / n counts.
    hw_pad = ((hw + 127) // 128) * 128

    # Row-tile sized to ~4 MiB per input buffer -> with double-buffered
    # in + out that's <= ~16 MiB of pipelined VMEM, safe on v5e/v6e/v7x
    # default scoped limits, and big enough to sit near the HBM roofline.
    target_tile_bytes = 4 * 1024 * 1024
    block_rows = (target_tile_bytes // (hw_pad * itemsize)) // 8 * 8
    block_rows = max(8, min(block_rows, 1024))
    rows_pad8 = ((rows + 7) // 8) * 8
    block_rows = min(block_rows, rows_pad8)

    grid_rows = pl.cdiv(rows, block_rows)
    rows_pad = grid_rows * block_rows

    x2d = x.reshape(rows, hw)
    if rows_pad != rows or hw_pad != hw:
        x2d = jnp.pad(x2d, ((0, rows_pad - rows), (0, hw_pad - hw)))

    kernel = functools.partial(_simam_kernel, n=n, hw=float(hw), e_lambda=e_lambda)

    out2d = pl.pallas_call(
        kernel,
        out_shape=jax.ShapeDtypeStruct((rows_pad, hw_pad), x.dtype),
        grid_spec=pltpu.PrefetchScalarGridSpec(
            num_scalar_prefetch=0,
            grid=(grid_rows,),
            in_specs=[pl.BlockSpec((block_rows, hw_pad), lambda i: (i, 0))],
            out_specs=pl.BlockSpec((block_rows, hw_pad), lambda i: (i, 0)),
        ),
        compiler_params=pltpu.CompilerParams(
            # Parallel row-block axis: megacore sharding on v7x, harmless on
            # single-TC v5e/v6e.
            dimension_semantics=("parallel",),
        ),
        cost_estimate=pl.CostEstimate(
            flops=10 * rows_pad * hw_pad,
            transcendentals=rows_pad * hw_pad,
            bytes_accessed=2 * rows_pad * hw_pad * itemsize,
        ),
    )(x2d)

    return out2d[:rows, :hw].reshape(b, c, h, w)


def _simam_ref(x, e_lambda=1e-4):
    b, c, h, w = x.shape
    n = w * h - 1
    mu = jnp.mean(x, axis=(2, 3), keepdims=True)
    d2 = (x - mu) ** 2
    y = d2 / (4.0 * (jnp.sum(d2, axis=(2, 3), keepdims=True) / n + e_lambda)) + 0.5
    return x * jax.nn.sigmoid(y)


if __name__ == "__main__":
    key = jax.random.PRNGKey(0)
    x = jax.random.normal(key, (2, 4, 16, 16), dtype=jnp.float32)

    out = simam(x)
    jax.block_until_ready(out)

    ref = _simam_ref(x)
    assert out.shape == x.shape and out.dtype == x.dtype
    # approx=True reciprocal -> allow a slightly looser tolerance.
    assert jnp.allclose(out, ref, atol=2e-3, rtol=2e-3), "mismatch vs reference"

    print("KERNEL_OK")
</pallas_src>

<mosaic_0001>
module attributes {stable_mosaic.version = 11 : i64} {
  func.func @_simam_kernel(%arg0: i32, %arg1: memref<8x256xf32, #tpu.memory_space<vmem>>, %arg2: memref<8x256xf32, #tpu.memory_space<vmem>>) attributes {dimension_semantics = [#tpu.dimension_semantics<parallel>], iteration_bounds = array<i64: 1>, scalar_prefetch = 0 : i64, scratch_operands = 0 : i64, tpu.core_type = #tpu.core_type<tc>, window_params = [{transform_indices = @transform_0, window_bounds = array<i64: 8, 256>}, {transform_indices = @transform_1, window_bounds = array<i64: 8, 256>}]} {
    %c0 = arith.constant 0 : index
    %c0_0 = arith.constant 0 : index
    %0 = vector.load %arg1[%c0, %c0_0] : memref<8x256xf32, #tpu.memory_space<vmem>>, vector<8x256xf32>
    %cst = arith.constant dense<0.000000e+00> : vector<8xf32>
    %1 = vector.multi_reduction <add>, %0, %cst [1] : vector<8x256xf32> to vector<8xf32>
    %2 = vector.shape_cast %1 : vector<8xf32> to vector<8x1xf32>
    %3 = arith.mulf %0, %0 : vector<8x256xf32>
    %cst_1 = arith.constant dense<0.000000e+00> : vector<8xf32>
    %4 = vector.multi_reduction <add>, %3, %cst_1 [1] : vector<8x256xf32> to vector<8xf32>
    %5 = vector.shape_cast %4 : vector<8xf32> to vector<8x1xf32>
    %cst_2 = arith.constant 3.906250e-03 : f32
    %6 = vector.broadcast %cst_2 : f32 to vector<8x1xf32>
    %7 = arith.mulf %2, %6 : vector<8x1xf32>
    %8 = arith.mulf %7, %2 : vector<8x1xf32>
    %9 = arith.subf %5, %8 : vector<8x1xf32>
    %cst_3 = arith.constant 0.0156862754 : f32
    %10 = vector.broadcast %cst_3 : f32 to vector<8x1xf32>
    %11 = arith.mulf %9, %10 : vector<8x1xf32>
    %cst_4 = arith.constant 4.000000e-04 : f32
    %12 = vector.broadcast %cst_4 : f32 to vector<8x1xf32>
    %13 = arith.addf %11, %12 : vector<8x1xf32>
    %14 = tpu.reciprocal %13 {approx = true} : vector<8x1xf32> -> vector<8x1xf32>
    %15 = vector.broadcast %7 : vector<8x1xf32> to vector<8x256xf32>
    %16 = arith.subf %0, %15 : vector<8x256xf32>
    %17 = arith.mulf %16, %16 : vector<8x256xf32>
    %18 = vector.broadcast %14 : vector<8x1xf32> to vector<8x256xf32>
    %19 = arith.mulf %17, %18 : vector<8x256xf32>
    %cst_5 = arith.constant 5.000000e-01 : f32
    %20 = vector.broadcast %cst_5 : f32 to vector<8x256xf32>
    %21 = arith.addf %19, %20 : vector<8x256xf32>
    %22 = arith.negf %21 : vector<8x256xf32>
    %23 = math.exp %22 : vector<8x256xf32>
    %cst_6 = arith.constant 1.000000e+00 : f32
    %24 = vector.broadcast %cst_6 : f32 to vector<8x256xf32>
    %25 = arith.addf %24, %23 : vector<8x256xf32>
    %26 = arith.divf %24, %25 : vector<8x256xf32>
    %27 = arith.mulf %0, %26 : vector<8x256xf32>
    %c0_7 = arith.constant 0 : index
    %c0_8 = arith.constant 0 : index
    %28 = vector.load %arg2[%c0_7, %c0_8] : memref<8x256xf32, #tpu.memory_space<vmem>>, vector<8x256xf32>
    tpu.vector_store %arg2[%c0_7, %c0_8], %27 {strides = array<i32>} : memref<8x256xf32, #tpu.memory_space<vmem>>, vector<8x256xf32>,
    return
  }
  func.func @transform_0(%arg0: i32) -> (i32, i32) {
    %c0_i32 = arith.constant 0 : i32
    %c0_i32_0 = arith.constant 0 : i32
    return %arg0, %c0_i32 : i32, i32
  }
  func.func @transform_1(%arg0: i32) -> (i32, i32) {
    %c0_i32 = arith.constant 0 : i32
    %c0_i32_0 = arith.constant 0 : i32
    return %arg0, %c0_i32 : i32, i32
  }
}

</mosaic_0001>

<llo_original>
// kernel: tpu_custom_call.1
$region0: #{tpu_custom_call.1}
  #allocation0 [shape = 'u32[]', space=smem, size = 0x4, offset = 0x4, fixed_abs, tag = 'smem constant byte address 0x4 - core index']
  #allocation1 [shape = 'u32[72,128]{1,0:T(1,128)}', space=vmem, size = 0x9000, scoped, tag = 'internal scratch']
  %s0 = inlined_call_operand.hbm [shape: f32[8,256], index: 0, kind: input, shape index: {}]
  %s1 = inlined_call_operand.hbm [shape: f32[8,256], index: 1, kind: output, shape index: {}]
  %s2 = sld [smem:[#allocation0]]
  $region18: #{tpu_custom_call.1} parent=0
    _
  %s4 = ssub.s32 1, %s2
  %s5 = scalar_select 0, %s4, %s2
  $region1: #{tpu_custom_call.1} parent=0
    #allocation2 [shape = 'u8[8192]{0}', space=vmem, size = 0x2000, scoped, tag = 'input window, operand 0, single buffered']
    #allocation3 [shape = 's32[1]{0}', space=sflag, size = 0x4, scoped, tag = 'scoped memory for tpu_custom_call.1']
    #allocation4 [shape = 's32[1]{0}', space=sflag, size = 0x4, scoped, tag = 'scoped memory for tpu_custom_call.1']
    #allocation5 [shape = 'u8[8192]{0}', space=vmem, size = 0x2000, scoped, tag = 'output window, operand 0, single buffered']
    %6 = vsyncpa [#allocation3], 0
    %7 = vsyncpa [#allocation4], 0
    // Predicated region
    $region2: #{tpu_custom_call.1} parent=1 // pred_check
      _
    $region3: #{tpu_custom_call.1} parent=1 // pred_check_branch
      %9 = sbr.rel (0) target = $region5
    $region4: #{tpu_custom_call.1} parent=1 // pred_region
      %11 = vsyncadd [#allocation3], 0
      %s13 = sshll.u32 %s0, 4
      %s14 = int_to_ptr.hbm [resolvable:$true] %s13
      %s15 = sshll.u32 [#allocation2], 4
      %s16 = int_to_ptr.vmem [resolvable:$true] %s15
      %18 = dma.hbm_to_vmem [thread:$0]  %s14, 256, %s16, [#allocation3]
    $region5: #{tpu_custom_call.1} parent=1 // pred_fallthru
      _
    // Predicated region
    $region6: #{tpu_custom_call.1} parent=1 // pred_check
      _
    $region7: #{tpu_custom_call.1} parent=1 // pred_check_branch
      %20 = sbr.rel (0) target = $region9
    $region8: #{tpu_custom_call.1} parent=1 // pred_region
      %22 = dma.done [#allocation3], 256
    $region9: #{tpu_custom_call.1} parent=1 // pred_fallthru
      _
    %v23 = vld [vmem:[#allocation2] sm:$0xff]
    %v24 = vld [vmem:[#allocation2 + $0x8] sm:$0xff]
    %v25 = vadd.f32 %v23, %v24
    %26 = vadd.xlane.f32.xlu0 %v25
    %v27 = vpop.xlane.xlu0 %26
    %v28 = vmul.f32 %v23, %v23
    %v29 = vmul.f32 %v24, %v24
    %v30 = vadd.f32 %v28, %v29
    %31 = vadd.xlane.f32.xlu0 %v30
    %v32 = vpop.xlane.xlu0 %31
    %v33 = vmul.f32 %v27, 0.00390625
    %v34 = vmul.f32 %v33, %v27
    %v35 = vsub.f32 %v32, %v34
    %v36 = vmul.f32 %v35, 0.015686275
    %v37 = vadd.f32 %v36, 0.0004
    %v38 = vrcp.pop %v37
    %v39 = vsub.f32 %v23, %v33
    %v40 = vsub.f32 %v24, %v33
    %v41 = vmul.f32 %v39, %v39
    %v42 = vmul.f32 %v40, %v40
    %v43 = vmul.f32 %v41, %v38
    %v44 = vmul.f32 %v42, %v38
    %v45 = vadd.f32 %v43, 0.5
    %v46 = vadd.f32 %v44, 0.5
    %v47 = vxor.u32 %v45, 2147483648
    %v48 = vxor.u32 %v46, 2147483648
    %v49 = vmul.f32 %v47, 1.442695
    %v50 = vpow.pop %v49
    %v51 = vmul.f32 %v48, 1.442695
    %v52 = vpow.pop %v51
    %v53 = vadd.f32 %v50, 1.0
    %v54 = vadd.f32 %v52, 1.0
    %v55 = vrcp.pop %v53
    %v56 = vmul.f32 %v53, %v55
    %v57 = vsub.f32 1.0, %v56
    %v58 = vmul.f32 %v55, %v57
    %v59 = vadd.f32 %v55, %v58
    %vm60 = vweird.f32 %v53
    %vm61 = vweird.f32 %v55
    %vm62 = vmor %vm60, %vm61
    %v63 = vsel %vm62, %v55, %v59
    %v64 = vand.u32 2147483647, %v53
    %vm65 = vcmp.eq.f32.partialorder %v64, 8.507059e+37
    %v66 = vand.u32 %v53, 2147483648
    %v67 = vor.u32 1.1754944e-38, %v66
    %v68 = vsel %vm65, %v67, %v63
    %v69 = vmul.f32 1.0, %v68
    %v70 = vrcp.pop %v54
    %v71 = vmul.f32 %v54, %v70
    %v72 = vsub.f32 1.0, %v71
    %v73 = vmul.f32 %v70, %v72
    %v74 = vadd.f32 %v70, %v73
    %vm75 = vweird.f32 %v54
    %vm76 = vweird.f32 %v70
    %vm77 = vmor %vm75, %vm76
    %v78 = vsel %vm77, %v70, %v74
    %v79 = vand.u32 2147483647, %v54
    %vm80 = vcmp.eq.f32.partialorder %v79, 8.507059e+37
    %v81 = vand.u32 %v54, 2147483648
    %v82 = vor.u32 1.1754944e-38, %v81
    %v83 = vsel %vm80, %v82, %v78
    %v84 = vmul.f32 1.0, %v83
    %v85 = vmul.f32 %v23, %v69
    %v86 = vmul.f32 %v24, %v84
    %87 = vst [vmem:[#allocation5] sm:$0xff] %v85
    %88 = vst [vmem:[#allocation5 + $0x8] sm:$0xff] %v86
    // Predicated region
    $region10: #{tpu_custom_call.1} parent=1 // pred_check
      _
    $region11: #{tpu_custom_call.1} parent=1 // pred_check_branch
      %90 = sbr.rel (0) target = $region13
    $region12: #{tpu_custom_call.1} parent=1 // pred_region
      %92 = vsyncadd [#allocation4], 0
      %s94 = sshll.u32 [#allocation5], 4
      %s95 = int_to_ptr.vmem [resolvable:$true] %s94
      %s96 = sshll.u32 %s1, 4
      %s97 = int_to_ptr.hbm [resolvable:$true] %s96
      %99 = dma.vmem_to_hbm [thread:$0]  %s95, 256, %s97, [#allocation4]
    $region13: #{tpu_custom_call.1} parent=1 // pred_fallthru
      _
    // Predicated region
    $region14: #{tpu_custom_call.1} parent=1 // pred_check
      _
    $region15: #{tpu_custom_call.1} parent=1 // pred_check_branch
      %101 = sbr.rel (0) target = $region17
    $region16: #{tpu_custom_call.1} parent=1 // pred_region
      %103 = dma.done [#allocation4], 256
    $region17: #{tpu_custom_call.1} parent=1 // pred_fallthru
      _
    %104 = vsyncpa [#allocation3], 1
    %105 = vsyncpa [#allocation4], 1

</llo_original>
